<compile_context>
chip_gen: v7x
topology: tpu7x:2x2x1
jax: 0.10.0
libtpu: 0.0.40
codegen_flags: <defaults>
</compile_context>

<pallas_src>
import jax
import jax.numpy as jnp
from jax.experimental import pallas as pl
from jax.experimental.pallas import tpu as pltpu


def general_attention_kernel(xs_ref, w_ref, out_ref):
    # xs_ref : (Bt, S, D_in)   this grid step's batch tile
    # w_ref  : (D_in, D_out)   shared projection weight (constant index_map)
    # out_ref: (Bt, D_out)     dense output slab (one unmasked store per step)
    xs_sum = jnp.sum(xs_ref[...], axis=1)                 # (Bt, D_in): pre-reduce over S
    out = jnp.dot(xs_sum, w_ref[...],                     # one MXU matmul per tile
                  preferred_element_type=jnp.float32)
    out_ref[...] = out.astype(out_ref.dtype)


def _choose_block_b(B, S, D_in, vmem_budget_bytes=8 << 20):
    """Pick how many batch elements to process per grid step."""
    # Fill the MXU M dimension (>= 8 output sublanes for unmasked stores,
    # Bt*S >= ~128 rows of xs per step) ...
    target = max(8, -(-128 // max(S, 1)))
    # ... while keeping the double-buffered f32 xs tile well under the scoped
    # VMEM default (32 MiB on v7x, which has half the VMEM of v5e/v6e).
    per_b_bytes = 2 * S * D_in * 4
    cap = max(1, vmem_budget_bytes // per_b_bytes)
    bt = min(target, cap, B)
    if bt >= B:
        return B                       # block dim == full array dim is always legal
    if bt >= 8:
        bt = (bt // 8) * 8             # multiple of 8 -> dense output sublanes
    return max(1, bt)


def general_attention(k, xs, w_mat):
    """Forward of GeneralAttention with mask=None.

    k     : (B, D_out)   -- unused: for mask=None the output is mathematically
                            independent of k (softmax rows sum to 1).
    xs    : (B, S, D_in)
    w_mat : (D_in, D_out) (torch Linear weight, pre-transposed)
    returns (B, D_out)
    """
    del k  # dead input on the mask=None path; avoids a useless DMA per step
    B, S, D_in = xs.shape
    D_out = w_mat.shape[1]

    bt = _choose_block_b(B, S, D_in)
    b_pad = ((B + bt - 1) // bt) * bt
    if b_pad != B:
        # zero rows sum to zero -> padded outputs are zero and sliced away
        xs = jnp.pad(xs, ((0, b_pad - B), (0, 0), (0, 0)))

    out = pl.pallas_call(
        general_attention_kernel,
        out_shape=jax.ShapeDtypeStruct((b_pad, D_out), xs.dtype),
        grid_spec=pltpu.PrefetchScalarGridSpec(
            num_scalar_prefetch=0,
            grid=(b_pad // bt,),
            in_specs=[
                pl.BlockSpec((bt, S, D_in), lambda b: (b, 0, 0)),   # xs batch tile
                # W is shared by every grid step (constant index_map). At real
                # model sizes, consider pipeline_mode=pl.Buffered(1) here to
                # avoid a useless second buffer; negligible at 32x32.
                pl.BlockSpec((D_in, D_out), lambda b: (0, 0)),
            ],
            out_specs=pl.BlockSpec((bt, D_out), lambda b: (b, 0)),
        ),
        compiler_params=pltpu.CompilerParams(
            # batch axis is independent -> shards across v7x's 2 TensorCores
            dimension_semantics=("parallel",)),
    )(xs, w_mat)
    return out[:B]


def general_attention_ref(k, xs, w_mat):
    """Pure-JAX reference mirroring the PyTorch module literally (mask=None)."""
    hi = jax.lax.Precision.HIGHEST
    S = xs.shape[1]
    ks = jnp.repeat(k[:, None, :], S, axis=1)                       # (B, S, D_out)
    xsW = jnp.einsum('bsd,de->bse', xs, w_mat, precision=hi)        # (B, S, D_out)
    w = jnp.einsum('bie,bje->bij', ks, xsW, precision=hi)           # (B, S, S)
    attn = jax.nn.softmax(w, axis=-1)
    return jnp.einsum('bij,bik->bk', attn, xsW, precision=hi)       # (B, D_out)


if __name__ == "__main__":
    def _run_case(key, B, S, D_in, D_out):
        k_key, x_key, w_key = jax.random.split(key, 3)
        # torch nn.Linear(in_dim, out_dim, bias=False) default init range,
        # stored directly as the (in_dim, out_dim) matrix used on the right.
        bound = 1.0 / (D_in ** 0.5)
        w_mat = jax.random.uniform(w_key, (D_in, D_out), jnp.float32, -bound, bound)
        k = jax.random.normal(k_key, (B, D_out), jnp.float32)
        xs = jax.random.normal(x_key, (B, S, D_in), jnp.float32)

        out = jax.block_until_ready(general_attention(k, xs, w_mat))
        ref = general_attention_ref(k, xs, w_mat)
        assert out.shape == (B, D_out)
        assert jnp.allclose(out, ref, rtol=1e-4, atol=1e-4), \
            f"mismatch vs reference (B={B}, S={S}, D_in={D_in}, D_out={D_out})"

    root = jax.random.PRNGKey(0)
    key0, key1 = jax.random.split(root)
    _run_case(key0, B=2, S=8, D_in=32, D_out=32)    # small spec-consistent shapes
    _run_case(key1, B=20, S=8, D_in=32, D_out=32)   # exercises Bt=16 blocking + batch padding

    print("KERNEL_OK")
</pallas_src>

<mosaic_0001>
module attributes {stable_mosaic.version = 11 : i64} {
  func.func @general_attention_kernel(%arg0: i32, %arg1: memref<2x8x32xf32, #tpu.memory_space<vmem>>, %arg2: memref<32x32xf32, #tpu.memory_space<vmem>>, %arg3: memref<2x32xf32, #tpu.memory_space<vmem>>) attributes {dimension_semantics = [#tpu.dimension_semantics<parallel>], iteration_bounds = array<i64: 1>, scalar_prefetch = 0 : i64, scratch_operands = 0 : i64, tpu.core_type = #tpu.core_type<tc>, window_params = [{transform_indices = @transform_0, window_bounds = array<i64: 2, 8, 32>}, {pipeline_mode = #tpu.pipeline_mode<synchronous>, transform_indices = @transform_1, window_bounds = array<i64: 32, 32>}, {transform_indices = @transform_2, window_bounds = array<i64: 2, 32>}]} {
    %c0 = arith.constant 0 : index
    %c0_0 = arith.constant 0 : index
    %c0_1 = arith.constant 0 : index
    %0 = vector.load %arg1[%c0, %c0_0, %c0_1] : memref<2x8x32xf32, #tpu.memory_space<vmem>>, vector<2x8x32xf32>
    %cst = arith.constant dense<0.000000e+00> : vector<2x32xf32>
    %1 = vector.multi_reduction <add>, %0, %cst [1] : vector<2x8x32xf32> to vector<2x32xf32>
    %c0_2 = arith.constant 0 : index
    %c0_3 = arith.constant 0 : index
    %2 = vector.load %arg2[%c0_2, %c0_3] : memref<32x32xf32, #tpu.memory_space<vmem>>, vector<32x32xf32>
    %cst_4 = arith.constant dense<0.000000e+00> : vector<2x32xf32>
    %3 = tpu.matmul %1, %2, %cst_4 {dimension_numbers = #tpu.dot_dimension_numbers<[1], [0], [0], [1], [0, 0, 1, 1], [], []>} : vector<2x32xf32>, vector<32x32xf32>, vector<2x32xf32> -> vector<2x32xf32>
    %c0_5 = arith.constant 0 : index
    %c0_6 = arith.constant 0 : index
    %4 = vector.load %arg3[%c0_5, %c0_6] : memref<2x32xf32, #tpu.memory_space<vmem>>, vector<2x32xf32>
    tpu.vector_store %arg3[%c0_5, %c0_6], %3 {strides = array<i32>} : memref<2x32xf32, #tpu.memory_space<vmem>>, vector<2x32xf32>,
    return
  }
  func.func @transform_0(%arg0: i32) -> (i32, i32, i32) {
    %c0_i32 = arith.constant 0 : i32
    %c0_i32_0 = arith.constant 0 : i32
    %c0_i32_1 = arith.constant 0 : i32
    return %arg0, %c0_i32, %c0_i32_0 : i32, i32, i32
  }
  func.func @transform_1(%arg0: i32) -> (i32, i32) {
    %c0_i32 = arith.constant 0 : i32
    %c0_i32_0 = arith.constant 0 : i32
    %c0_i32_1 = arith.constant 0 : i32
    return %c0_i32, %c0_i32_0 : i32, i32
  }
  func.func @transform_2(%arg0: i32) -> (i32, i32) {
    %c0_i32 = arith.constant 0 : i32
    %c0_i32_0 = arith.constant 0 : i32
    return %arg0, %c0_i32 : i32, i32
  }
}

</mosaic_0001>

<llo_original>
// kernel: tpu_custom_call.1
$region0: #{tpu_custom_call.1}
  #allocation0 [shape = 'u32[]', space=smem, size = 0x4, offset = 0x4, fixed_abs, tag = 'smem constant byte address 0x4 - core index']
  #allocation1 [shape = 'u32[144,128]{1,0:T(1,128)}', space=vmem, size = 0x12000, scoped, tag = 'internal scratch']
  %s0 = inlined_call_operand.hbm [shape: f32[2,8,32], index: 0, kind: input, shape index: {}]
  %s1 = inlined_call_operand.hbm [shape: f32[32,32], index: 1, kind: input, shape index: {}]
  %s2 = inlined_call_operand.hbm [shape: f32[2,32], index: 2, kind: output, shape index: {}]
  %s3 = sld [smem:[#allocation0]]
  $region26: #{tpu_custom_call.1} parent=0
    _
  %s5 = ssub.s32 1, %s3
  %s6 = scalar_select 0, %s5, %s3
  $region1: #{tpu_custom_call.1} parent=0
    #allocation2 [shape = 'u8[8192]{0}', space=vmem, size = 0x2000, scoped, tag = 'input window, operand 0, single buffered']
    #allocation3 [shape = 's32[1]{0}', space=sflag, size = 0x4, scoped, tag = 'scoped memory for tpu_custom_call.1']
    #allocation4 [shape = 's32[1]{0}', space=sflag, size = 0x4, scoped, tag = 'scoped memory for tpu_custom_call.1']
    #allocation5 [shape = 'u8[16384]{0}', space=vmem, size = 0x4000, scoped, tag = 'input window, operand 1, single buffered']
    #allocation6 [shape = 's32[1]{0}', space=sflag, size = 0x4, scoped, tag = 'scoped memory for tpu_custom_call.1']
    #allocation7 [shape = 'u8[1024]{0}', space=vmem, size = 0x400, scoped, tag = 'output window, operand 0, single buffered']
    %7 = vsyncpa [#allocation3], 0
    %8 = vsyncpa [#allocation6], 0
    %9 = vsyncpa [#allocation4], 0
    // Predicated region
    $region2: #{tpu_custom_call.1} parent=1 // pred_check
      _
    $region3: #{tpu_custom_call.1} parent=1 // pred_check_branch
      %11 = sbr.rel (0) target = $region5
    $region4: #{tpu_custom_call.1} parent=1 // pred_region
      %s13 = ssub.s32 256, 256
      %14 = vsyncadd [#allocation3], %s13
      %s15 = sshll.u32 [#allocation2], 4
      %s16 = int_to_ptr.vmem [resolvable:$true] %s15
      %21 = dma.hbm_to_vmem [thread:$0]  %s0, 256, %s16, [#allocation3], 128, 128, 8
    $region5: #{tpu_custom_call.1} parent=1 // pred_fallthru
      _
    // Predicated region
    $region6: #{tpu_custom_call.1} parent=1 // pred_check
      _
    $region7: #{tpu_custom_call.1} parent=1 // pred_check_branch
      %23 = sbr.rel (0) target = $region9
    $region8: #{tpu_custom_call.1} parent=1 // pred_region
      %s25 = ssub.s32 512, 512
      %26 = vsyncadd [#allocation6], %s25
      %s27 = sshll.u32 [#allocation5], 4
      %s28 = int_to_ptr.vmem [resolvable:$true] %s27
      %33 = dma.hbm_to_vmem [thread:$0]  %s1, 512, %s28, [#allocation6], 128, 128, 8
    $region9: #{tpu_custom_call.1} parent=1 // pred_fallthru
      _
    // Predicated region
    $region10: #{tpu_custom_call.1} parent=1 // pred_check
      _
    $region11: #{tpu_custom_call.1} parent=1 // pred_check_branch
      %35 = sbr.rel (0) target = $region13
    $region12: #{tpu_custom_call.1} parent=1 // pred_region
      %36 = dma.done [#allocation3], 256
    $region13: #{tpu_custom_call.1} parent=1 // pred_fallthru
      _
    // Predicated region
    $region14: #{tpu_custom_call.1} parent=1 // pred_check
      _
    $region15: #{tpu_custom_call.1} parent=1 // pred_check_branch
      %38 = sbr.rel (0) target = $region17
    $region16: #{tpu_custom_call.1} parent=1 // pred_region
      %39 = dma.done [#allocation6], 512
    $region17: #{tpu_custom_call.1} parent=1 // pred_fallthru
      _
    %v40 = vld [vmem:[#allocation2] sm:$0xff]
    %v41 = vld [vmem:[#allocation2 + $0x8] sm:$0xff]
    %vm42 = vcmask 261120
    %v43 = vsel %vm42, %v40, 0.0
    %v44 = vrot.slane %v43, 4
    %v45 = vadd.f32 %v43, %v44
    %v46 = vrot.slane %v45, 2
    %v47 = vadd.f32 %v45, %v46
    %v48 = vrot.slane %v47, 1
    %v49 = vadd.f32 %v47, %v48
    %v50 = vsel %vm42, %v41, 0.0
    %v51 = vrot.slane %v50, 4
    %v52 = vadd.f32 %v50, %v51
    %v53 = vrot.slane %v52, 2
    %v54 = vadd.f32 %v52, %v53
    %v55 = vrot.slane %v54, 1
    %v56 = vadd.f32 %v54, %v55
    %v57 = vld [vmem:[#allocation5] sm:$0xff]
    %v58 = vld [vmem:[#allocation5 + $0x8] sm:$0xff]
    %v59 = vld [vmem:[#allocation5 + $0x10] sm:$0xff]
    %v60 = vld [vmem:[#allocation5 + $0x18] sm:$0xff]
    %vm63 = vcmask 1041409
    %v64 = vsel %vm63, %v56, %v49
    %v65 = vsel %vm42, %v64, 0
    %67 = vmatprep.subr.mxu0 0.0
    %68 = vmatpush1.msra.mxu0 %v57
    %69 = vmatprep.subr.mxu0 0.0
    %70 = vmatpush1.msra.mxu0 %v58
    %71 = vmatprep.subr.mxu0 0.0
    %72 = vmatpush1.msra.mxu0 %v59
    %73 = vmatprep.subr.mxu0 0.0
    %74 = vmatpush1.msra.mxu0 %v60
    %75 = vmatprep.subr.mxu0 0.0
    %76 = vmatpush1.msra.mxu0 0.0
    %77 = vmatprep.subr.mxu0 0.0
    %78 = vmatpush1.msra.mxu0 0.0
    %79 = vmatprep.subr.mxu0 0.0
    %80 = vmatpush1.msra.mxu0 0.0
    %81 = vmatprep.subr.mxu0 0.0
    %82 = vmatpush1.msra.mxu0 0.0
    %83 = vmatprep.subr.mxu0 0.0
    %84 = vmatpush1.msra.mxu0 0.0
    %85 = vmatprep.subr.mxu0 0.0
    %86 = vmatpush1.msra.mxu0 0.0
    %87 = vmatprep.subr.mxu0 0.0
    %88 = vmatpush1.msra.mxu0 0.0
    %89 = vmatprep.subr.mxu0 0.0
    %90 = vmatpush1.msra.mxu0 0.0
    %91 = vmatprep.subr.mxu0 0.0
    %92 = vmatpush1.msra.mxu0 0.0
    %93 = vmatprep.subr.mxu0 0.0
    %94 = vmatpush1.msra.mxu0 0.0
    %95 = vmatprep.subr.mxu0 0.0
    %96 = vmatpush1.msra.mxu0 0.0
    %97 = vmatprep.subr.mxu0 0.0
    %98 = vmatpush1.msra.mxu0 0.0
    %99 = vmatprep.subr.mxu0 0.0
    %100 = vmatpush1.msra.mxu0 0.0
    %101 = vmatprep.subr.mxu0 0.0
    %102 = vmatpush1.msra.mxu0 0.0
    %103 = vmatprep.subr.mxu0 0.0
    %104 = vmatpush1.msra.mxu0 0.0
    %105 = vmatprep.subr.mxu0 0.0
    %106 = vmatpush1.msra.mxu0 0.0
    %107 = vmatprep.subr.mxu0 0.0
    %108 = vmatpush1.msra.mxu0 0.0
    %109 = vmatprep.subr.mxu0 0.0
    %110 = vmatpush1.msra.mxu0 0.0
    %111 = vmatprep.subr.mxu0 0.0
    %112 = vmatpush1.msra.mxu0 0.0
    %113 = vmatprep.subr.mxu0 0.0
    %114 = vmatpush1.msra.mxu0 0.0
    %115 = vmatprep.subr.mxu0 0.0
    %116 = vmatpush1.msra.mxu0 0.0
    %117 = vmatprep.subr.mxu0 0.0
    %118 = vmatpush1.msra.mxu0 0.0
    %119 = vmatprep.subr.mxu0 0.0
    %120 = vmatpush1.msra.mxu0 0.0
    %121 = vmatprep.subr.mxu0 0.0
    %122 = vmatpush1.msra.mxu0 0.0
    %123 = vmatprep.subr.mxu0 0.0
    %124 = vmatpush1.msra.mxu0 0.0
    %125 = vmatprep.subr.mxu0 0.0
    %126 = vmatpush1.msra.mxu0 0.0
    %127 = vmatprep.subr.mxu0 0.0
    %128 = vmatpush1.msra.mxu0 0.0
    %129 = vmatprep.subr.mxu0 0.0
    %130 = vmatpush1.msra.mxu0 0.0
    %131 = vmatprep.mubr.f32.mxu0 0.0
    %132 = vmatmul.mubr.f32.gmra.mrb[0].mxu0 %v65
    %v133 = vpop.f32.mrb[0].mxu0
    %v134 = vadd.f32 0.0, %v133
    %v135 = vpop.f32.mrb[0].mxu0
    %136 = vdwg.mxu0
    %vm137 = vcmask 254976
    %138 = vst.msk [vmem:[#allocation7] sm:$0x3] %vm137, %v134
    // Predicated region
    $region18: #{tpu_custom_call.1} parent=1 // pred_check
      _
    $region19: #{tpu_custom_call.1} parent=1 // pred_check_branch
      %140 = sbr.rel (0) target = $region21
    $region20: #{tpu_custom_call.1} parent=1 // pred_region
      %s142 = ssub.s32 32, 32
      %143 = vsyncadd [#allocation4], %s142
      %s145 = sshll.u32 [#allocation7], 4
      %s146 = int_to_ptr.vmem [resolvable:$true] %s145
      %148 = dma.vmem_to_hbm [thread:$0]  %s146, 32, %s2, [#allocation4]
    $region21: #{tpu_custom_call.1} parent=1 // pred_fallthru
      _
    // Predicated region
    $region22: #{tpu_custom_call.1} parent=1 // pred_check
      _
    $region23: #{tpu_custom_call.1} parent=1 // pred_check_branch
      %150 = sbr.rel (0) target = $region25
    $region24: #{tpu_custom_call.1} parent=1 // pred_region
      %151 = dma.done [#allocation4], 32
    $region25: #{tpu_custom_call.1} parent=1 // pred_fallthru
      _
    %152 = vsyncpa [#allocation3], 1
    %153 = vsyncpa [#allocation6], 1
    %154 = vsyncpa [#allocation4], 1

</llo_original>
